<compile_context>
chip_gen: v7x
topology: tpu7x:2x2x1
jax: 0.10.0
libtpu: 0.0.40
codegen_flags: <defaults>
</compile_context>

<pallas_src>
import functools
import math

import jax
import jax.numpy as jnp
from jax import lax
from jax.experimental import pallas as pl
from jax.experimental.pallas import tpu as pltpu


# ---------------------------------------------------------------------------
# Kernel 1: fused QKV projection (one pass over the sequence, never repeated).
# ---------------------------------------------------------------------------
def _qkv_proj_kernel(x_ref, w_ref, b_ref, q_ref, k_ref, v_ref, *, embed_dim, scale):
    E = embed_dim
    x = x_ref[0]                                                   # (TP, E) bf16
    qkv = jnp.dot(x, w_ref[...], preferred_element_type=jnp.float32) + b_ref[...]
    q_ref[0] = (qkv[:, :E] * scale).astype(q_ref.dtype)           # scale folded into Q
    k_ref[0] = qkv[:, E:2 * E].astype(k_ref.dtype)
    v_ref[0] = qkv[:, 2 * E:].astype(v_ref.dtype)


# ---------------------------------------------------------------------------
# Kernel 2: flash-style attention (online softmax over KV blocks) + out proj.
# ---------------------------------------------------------------------------
def _flash_attn_kernel(q_ref, k_ref, v_ref, wo_ref, bo_ref, o_ref,
                       m_ref, l_ref, acc_ref, *, num_heads, head_dim, group):
    H, D = num_heads, head_dim
    ki = pl.program_id(2)

    @pl.when(ki == 0)
    def _():
        m_ref[...] = jnp.full_like(m_ref, -jnp.inf)
        l_ref[...] = jnp.zeros_like(l_ref)
        acc_ref[...] = jnp.zeros_like(acc_ref)

    q = q_ref[0]    # (TQ, E) bf16 (pre-scaled)
    k = k_ref[0]    # (TK, E) bf16
    v = v_ref[0]    # (TK, E) bf16

    # Per-head online softmax.  Heads are processed in groups so the acc
    # read-modify-write covers a 128-lane-aligned slab when head_dim | 128.
    # TODO(synk): for very large H (>= 12) switch to lax.fori_loop over a
    # head-major layout to bound code size / vreg pressure.
    for g0 in range(0, H, group):
        gh = min(group, H - g0)
        pv_cols, alpha_cols = [], []
        for idx in range(gh):
            h = g0 + idx
            lo = h * D
            q_h = q[:, lo:lo + D]                                  # (TQ, D)
            k_h = k[:, lo:lo + D]                                  # (TK, D)
            v_h = v[:, lo:lo + D]                                  # (TK, D)

            # scores = q_h @ k_h^T (contract head_dim, no explicit transpose)
            s = lax.dot_general(q_h, k_h, (((1,), (1,)), ((), ())),
                                preferred_element_type=jnp.float32)  # (TQ, TK)

            m_prev = m_ref[:, h:h + 1]
            m_new = jnp.maximum(m_prev, jnp.max(s, axis=-1, keepdims=True))
            alpha = jnp.exp(m_prev - m_new)                        # (TQ, 1)
            p = jnp.exp(s - m_new)                                 # (TQ, TK)
            l_ref[:, h:h + 1] = alpha * l_ref[:, h:h + 1] + jnp.sum(p, axis=-1,
                                                                    keepdims=True)
            m_ref[:, h:h + 1] = m_new

            # Deferred normalization: un-normalized PV; 1/l applied at the end.
            pv_cols.append(jnp.dot(p.astype(jnp.bfloat16), v_h,
                                   preferred_element_type=jnp.float32))  # (TQ, D)
            alpha_cols.append(alpha)

        glo, gw = g0 * D, gh * D
        if gh == 1:
            acc_ref[:, glo:glo + gw] = (alpha_cols[0] * acc_ref[:, glo:glo + gw]
                                        + pv_cols[0])
        else:
            pv_slab = jnp.concatenate(pv_cols, axis=-1)            # (TQ, gw)
            a_slab = jnp.concatenate(
                [jnp.broadcast_to(a, (a.shape[0], D)) for a in alpha_cols], axis=-1)
            acc_ref[:, glo:glo + gw] = a_slab * acc_ref[:, glo:glo + gw] + pv_slab

    @pl.when(ki == pl.num_programs(2) - 1)
    def _():
        inv_l = pl.reciprocal(l_ref[...], approx=True)             # (TQ, H)
        for h in range(H):
            lo = h * D
            acc_ref[:, lo:lo + D] = acc_ref[:, lo:lo + D] * inv_l[:, h:h + 1]
        ctx = acc_ref[...].astype(jnp.bfloat16)                    # (TQ, E)
        out = jnp.dot(ctx, wo_ref[...], preferred_element_type=jnp.float32) + bo_ref[...]
        o_ref[0] = out.astype(o_ref.dtype)


# ---------------------------------------------------------------------------
# Wrapper
# ---------------------------------------------------------------------------
def _choose_tile(n, candidates):
    for c in candidates:
        if n % c == 0:
            return c
    return n


def _head_group(num_heads, head_dim, embed_dim):
    """Group heads so acc slab updates are 128-lane aligned (when possible)."""
    if embed_dim <= 128:
        return 1                     # whole row lives in one lane tile already
    if head_dim % 128 == 0:
        return 1                     # per-head slices already aligned
    if 128 % head_dim == 0:
        return 128 // head_dim       # e.g. D=64 -> pairs, D=32 -> quads
    return 1


def _vmem_limit_bytes():
    try:
        cap = int(pltpu.get_tpu_info().vmem_capacity_bytes)
    except Exception:
        cap = 128 * 1024 * 1024
    # ~75% of physical with a hard cap: <= 48 MB on v7x, up to 96 MB on v5e/v6e.
    return int(min(cap * 3 // 4, 96 * 1024 * 1024))


def attention_forward(hidden_states, params, num_heads):
    """hidden_states: (B, T, E) float32.  params: transposed (in,out) weights."""
    B, T, E = hidden_states.shape
    D = E // num_heads
    assert D * num_heads == E
    scale = 1.0 / math.sqrt(D)
    vmem_limit = _vmem_limit_bytes()

    # bf16 operands at the boundary: halves DMA bytes and removes per-step casts.
    x_bf16 = hidden_states.astype(jnp.bfloat16)
    w_qkv = jnp.concatenate([params["wq"], params["wk"], params["wv"]],
                            axis=1).astype(jnp.bfloat16)            # (E, 3E)
    b_qkv = jnp.concatenate([params["bq"], params["bk"], params["bv"]]
                            )[None, :].astype(jnp.float32)          # (1, 3E)
    w_o = params["wo"].astype(jnp.bfloat16)                         # (E, E)
    b_o = params["bo"][None, :].astype(jnp.float32)                 # (1, E)

    # ---- Kernel 1: QKV projection, computed once per sequence tile. ----
    p_tile = _choose_tile(T, (512, 256, 128))
    num_p_tiles = T // p_tile
    qkv_kernel = functools.partial(_qkv_proj_kernel, embed_dim=E, scale=scale)
    proj_spec = pl.BlockSpec((1, p_tile, E), lambda b, i: (b, i, 0))
    q, k, v = pl.pallas_call(
        qkv_kernel,
        out_shape=(jax.ShapeDtypeStruct((B, T, E), jnp.bfloat16),
                   jax.ShapeDtypeStruct((B, T, E), jnp.bfloat16),
                   jax.ShapeDtypeStruct((B, T, E), jnp.bfloat16)),
        grid=(B, num_p_tiles),
        in_specs=[
            proj_spec,                                              # x tile
            pl.BlockSpec((E, 3 * E), lambda b, i: (0, 0)),          # fused Wqkv (bf16)
            pl.BlockSpec((1, 3 * E), lambda b, i: (0, 0)),          # fused bias
        ],
        out_specs=(proj_spec, proj_spec, proj_spec),
        compiler_params=pltpu.CompilerParams(
            dimension_semantics=("parallel", "parallel"),
            vmem_limit_bytes=vmem_limit),
    )(x_bf16, w_qkv, b_qkv)

    # ---- Kernel 2: flash attention + fused output projection. ----
    q_tile = _choose_tile(T, (256, 128))
    kv_tile = _choose_tile(T, (512, 256, 128))
    num_q_tiles = T // q_tile
    num_kv_tiles = T // kv_tile
    attn_kernel = functools.partial(
        _flash_attn_kernel, num_heads=num_heads, head_dim=D,
        group=_head_group(num_heads, D, E))

    return pl.pallas_call(
        attn_kernel,
        out_shape=jax.ShapeDtypeStruct((B, T, E), hidden_states.dtype),
        grid=(B, num_q_tiles, num_kv_tiles),
        in_specs=[
            pl.BlockSpec((1, q_tile, E), lambda b, qi, ki: (b, qi, 0)),   # Q tile
            pl.BlockSpec((1, kv_tile, E), lambda b, qi, ki: (b, ki, 0)),  # K tile
            pl.BlockSpec((1, kv_tile, E), lambda b, qi, ki: (b, ki, 0)),  # V tile
            pl.BlockSpec((E, E), lambda b, qi, ki: (0, 0)),               # Wo (bf16)
            pl.BlockSpec((1, E), lambda b, qi, ki: (0, 0)),               # bo
        ],
        out_specs=pl.BlockSpec((1, q_tile, E), lambda b, qi, ki: (b, qi, 0)),
        scratch_shapes=[
            pltpu.VMEM((q_tile, num_heads), jnp.float32),   # running max  m
            pltpu.VMEM((q_tile, num_heads), jnp.float32),   # running sum  l
            pltpu.VMEM((q_tile, E), jnp.float32),           # context acc
        ],
        compiler_params=pltpu.CompilerParams(
            dimension_semantics=("parallel", "parallel", "arbitrary"),
            vmem_limit_bytes=vmem_limit),
    )(q, k, v, w_o, b_o)


# ---------------------------------------------------------------------------
# Pure-JAX reference (torch SDPA semantics: no mask, no dropout) + test driver
# ---------------------------------------------------------------------------
def _reference_forward(x, params, num_heads):
    B, T, E = x.shape
    D = E // num_heads
    hp = jax.lax.Precision.HIGHEST

    def proj(w, b):
        return jnp.einsum("bte,ef->btf", x, w, precision=hp) + b

    q = proj(params["wq"], params["bq"]).reshape(B, T, num_heads, D).transpose(0, 2, 1, 3)
    k = proj(params["wk"], params["bk"]).reshape(B, T, num_heads, D).transpose(0, 2, 1, 3)
    v = proj(params["wv"], params["bv"]).reshape(B, T, num_heads, D).transpose(0, 2, 1, 3)

    scores = jnp.einsum("bhqd,bhkd->bhqk", q, k, precision=hp) / jnp.sqrt(D).astype(x.dtype)
    p = jax.nn.softmax(scores, axis=-1)
    ctx = jnp.einsum("bhqk,bhkd->bhqd", p, v, precision=hp)
    ctx = ctx.transpose(0, 2, 1, 3).reshape(B, T, E)
    return jnp.einsum("bte,ef->btf", ctx, params["wo"], precision=hp) + params["bo"]


def init_params(key, embed_dim):
    keys = jax.random.split(key, 8)
    bound = 1.0 / (embed_dim ** 0.5)
    u = lambda k, shape: jax.random.uniform(k, shape, jnp.float32, -bound, bound)
    return {
        "wq": u(keys[0], (embed_dim, embed_dim)),
        "wk": u(keys[1], (embed_dim, embed_dim)),
        "wv": u(keys[2], (embed_dim, embed_dim)),
        "wo": u(keys[3], (embed_dim, embed_dim)),
        "bq": u(keys[4], (embed_dim,)),
        "bk": u(keys[5], (embed_dim,)),
        "bv": u(keys[6], (embed_dim,)),
        "bo": u(keys[7], (embed_dim,)),
    }


if __name__ == "__main__":
    # Small shapes consistent with the module: batch=2, seq=8, embed_dim=32, heads=4.
    B, T, E, H = 2, 8, 32, 4

    key = jax.random.PRNGKey(0)
    k_x, k_p = jax.random.split(key)
    x = jax.random.normal(k_x, (B, T, E), dtype=jnp.float32)
    params = init_params(k_p, E)

    out = attention_forward(x, params, num_heads=H)
    out = jax.block_until_ready(out)

    ref = jax.block_until_ready(_reference_forward(x, params, num_heads=H))
    assert out.shape == (B, T, E)
    # bf16 MXU operands + approx reciprocal -> slightly looser tolerance vs f32 ref.
    assert jnp.allclose(out, ref, rtol=2e-2, atol=2e-2), "mismatch vs reference"

    print("KERNEL_OK")
</pallas_src>

<mosaic_0001>
module attributes {stable_mosaic.version = 11 : i64} {
  func.func @_qkv_proj_kernel(%arg0: i32, %arg1: i32, %arg2: memref<1x8x32xbf16, #tpu.memory_space<vmem>>, %arg3: memref<32x96xbf16, #tpu.memory_space<vmem>>, %arg4: memref<1x96xf32, #tpu.memory_space<vmem>>, %arg5: memref<1x8x32xbf16, #tpu.memory_space<vmem>>, %arg6: memref<1x8x32xbf16, #tpu.memory_space<vmem>>, %arg7: memref<1x8x32xbf16, #tpu.memory_space<vmem>>) attributes {dimension_semantics = [#tpu.dimension_semantics<parallel>, #tpu.dimension_semantics<parallel>], iteration_bounds = array<i64: 2, 1>, scalar_prefetch = 0 : i64, scratch_operands = 0 : i64, tpu.core_type = #tpu.core_type<tc>, window_params = [{transform_indices = @transform_0, window_bounds = array<i64: 1, 8, 32>}, {pipeline_mode = #tpu.pipeline_mode<synchronous>, transform_indices = @transform_1, window_bounds = array<i64: 32, 96>}, {pipeline_mode = #tpu.pipeline_mode<synchronous>, transform_indices = @transform_2, window_bounds = array<i64: 1, 96>}, {transform_indices = @transform_3, window_bounds = array<i64: 1, 8, 32>}, {transform_indices = @transform_4, window_bounds = array<i64: 1, 8, 32>}, {transform_indices = @transform_5, window_bounds = array<i64: 1, 8, 32>}]} {
    %c0 = arith.constant 0 : index
    %c0_0 = arith.constant 0 : index
    %c0_1 = arith.constant 0 : index
    %0 = vector.load %arg2[%c0, %c0_0, %c0_1] : memref<1x8x32xbf16, #tpu.memory_space<vmem>>, vector<1x8x32xbf16>
    %1 = vector.shape_cast %0 : vector<1x8x32xbf16> to vector<8x32xbf16>
    %c0_2 = arith.constant 0 : index
    %c0_3 = arith.constant 0 : index
    %2 = vector.load %arg3[%c0_2, %c0_3] : memref<32x96xbf16, #tpu.memory_space<vmem>>, vector<32x96xbf16>
    %cst = arith.constant dense<0.000000e+00> : vector<8x96xf32>
    %3 = tpu.matmul %1, %2, %cst {dimension_numbers = #tpu.dot_dimension_numbers<[1], [0], [0], [1], [0, 0, 1, 1], [], []>} : vector<8x32xbf16>, vector<32x96xbf16>, vector<8x96xf32> -> vector<8x96xf32>
    %c0_4 = arith.constant 0 : index
    %c0_5 = arith.constant 0 : index
    %4 = vector.load %arg4[%c0_4, %c0_5] : memref<1x96xf32, #tpu.memory_space<vmem>>, vector<1x96xf32>
    %5 = vector.broadcast %4 : vector<1x96xf32> to vector<8x96xf32>
    %6 = arith.addf %3, %5 : vector<8x96xf32>
    %7 = vector.extract_strided_slice %6 {offsets = [0, 0], sizes = [8, 32], strides = [1, 1]} : vector<8x96xf32> to vector<8x32xf32>
    %cst_6 = arith.constant 0.353553385 : f32
    %8 = vector.broadcast %cst_6 : f32 to vector<8x32xf32>
    %9 = arith.mulf %7, %8 : vector<8x32xf32>
    %10 = arith.truncf %9 : vector<8x32xf32> to vector<8x32xbf16>
    %c0_7 = arith.constant 0 : index
    %c0_8 = arith.constant 0 : index
    %c0_9 = arith.constant 0 : index
    %11 = vector.load %arg5[%c0_7, %c0_8, %c0_9] : memref<1x8x32xbf16, #tpu.memory_space<vmem>>, vector<1x8x32xbf16>
    %12 = vector.shape_cast %11 : vector<1x8x32xbf16> to vector<8x32xbf16>
    %13 = vector.shape_cast %10 : vector<8x32xbf16> to vector<1x8x32xbf16>
    tpu.vector_store %arg5[%c0_7, %c0_8, %c0_9], %13 {strides = array<i32>} : memref<1x8x32xbf16, #tpu.memory_space<vmem>>, vector<1x8x32xbf16>,
    %14 = vector.extract_strided_slice %6 {offsets = [0, 32], sizes = [8, 32], strides = [1, 1]} : vector<8x96xf32> to vector<8x32xf32>
    %15 = arith.truncf %14 : vector<8x32xf32> to vector<8x32xbf16>
    %c0_10 = arith.constant 0 : index
    %c0_11 = arith.constant 0 : index
    %c0_12 = arith.constant 0 : index
    %16 = vector.load %arg6[%c0_10, %c0_11, %c0_12] : memref<1x8x32xbf16, #tpu.memory_space<vmem>>, vector<1x8x32xbf16>
    %17 = vector.shape_cast %16 : vector<1x8x32xbf16> to vector<8x32xbf16>
    %18 = vector.shape_cast %15 : vector<8x32xbf16> to vector<1x8x32xbf16>
    tpu.vector_store %arg6[%c0_10, %c0_11, %c0_12], %18 {strides = array<i32>} : memref<1x8x32xbf16, #tpu.memory_space<vmem>>, vector<1x8x32xbf16>,
    %19 = vector.extract_strided_slice %6 {offsets = [0, 64], sizes = [8, 32], strides = [1, 1]} : vector<8x96xf32> to vector<8x32xf32>
    %20 = arith.truncf %19 : vector<8x32xf32> to vector<8x32xbf16>
    %c0_13 = arith.constant 0 : index
    %c0_14 = arith.constant 0 : index
    %c0_15 = arith.constant 0 : index
    %21 = vector.load %arg7[%c0_13, %c0_14, %c0_15] : memref<1x8x32xbf16, #tpu.memory_space<vmem>>, vector<1x8x32xbf16>
    %22 = vector.shape_cast %21 : vector<1x8x32xbf16> to vector<8x32xbf16>
    %23 = vector.shape_cast %20 : vector<8x32xbf16> to vector<1x8x32xbf16>
    tpu.vector_store %arg7[%c0_13, %c0_14, %c0_15], %23 {strides = array<i32>} : memref<1x8x32xbf16, #tpu.memory_space<vmem>>, vector<1x8x32xbf16>,
    return
  }
  func.func @transform_0(%arg0: i32, %arg1: i32) -> (i32, i32, i32) {
    %c0_i32 = arith.constant 0 : i32
    %c0_i32_0 = arith.constant 0 : i32
    return %arg0, %arg1, %c0_i32 : i32, i32, i32
  }
  func.func @transform_1(%arg0: i32, %arg1: i32) -> (i32, i32) {
    %c0_i32 = arith.constant 0 : i32
    %c0_i32_0 = arith.constant 0 : i32
    %c0_i32_1 = arith.constant 0 : i32
    return %c0_i32, %c0_i32_0 : i32, i32
  }
  func.func @transform_2(%arg0: i32, %arg1: i32) -> (i32, i32) {
    %c0_i32 = arith.constant 0 : i32
    %c0_i32_0 = arith.constant 0 : i32
    %c0_i32_1 = arith.constant 0 : i32
    return %c0_i32, %c0_i32_0 : i32, i32
  }
  func.func @transform_3(%arg0: i32, %arg1: i32) -> (i32, i32, i32) {
    %c0_i32 = arith.constant 0 : i32
    %c0_i32_0 = arith.constant 0 : i32
    return %arg0, %arg1, %c0_i32 : i32, i32, i32
  }
  func.func @transform_4(%arg0: i32, %arg1: i32) -> (i32, i32, i32) {
    %c0_i32 = arith.constant 0 : i32
    %c0_i32_0 = arith.constant 0 : i32
    return %arg0, %arg1, %c0_i32 : i32, i32, i32
  }
  func.func @transform_5(%arg0: i32, %arg1: i32) -> (i32, i32, i32) {
    %c0_i32 = arith.constant 0 : i32
    %c0_i32_0 = arith.constant 0 : i32
    return %arg0, %arg1, %c0_i32 : i32, i32, i32
  }
}

</mosaic_0001>

<llo_original>
// kernel: tpu_custom_call.1
$region0: #{tpu_custom_call.1}
  #allocation0 [shape = 'u32[]', space=smem, size = 0x4, offset = 0x4, fixed_abs, tag = 'smem constant byte address 0x4 - core index']
  #allocation1 [shape = 'u32[144,128]{1,0:T(1,128)}', space=vmem, size = 0x12000, scoped, tag = 'internal scratch']
  %s0 = inlined_call_operand.hbm [shape: bf16[2,8,32], index: 0, kind: input, shape index: {}]
  %s1 = inlined_call_operand.hbm [shape: bf16[32,96], index: 1, kind: input, shape index: {}]
  %s2 = inlined_call_operand.hbm [shape: f32[1,96], index: 2, kind: input, shape index: {}]
  %s3 = inlined_call_operand.hbm [shape: bf16[2,8,32], index: 3, kind: output, shape index: {0}]
  %s4 = inlined_call_operand.hbm [shape: bf16[2,8,32], index: 4, kind: output, shape index: {1}]
  %s5 = inlined_call_operand.hbm [shape: bf16[2,8,32], index: 5, kind: output, shape index: {2}]
  %6 = xla_tuple %s3, %s4, %s5
  %s7 = sld [smem:[#allocation0]]
  $region73: #{tpu_custom_call.1} parent=0
    _
  %s9 = ssub.s32 1, %s7
  %s10 = scalar_select 0, %s9, %s7
  $region1: #{tpu_custom_call.1} parent=0
    #allocation2 [shape = 'u8[4096]{0}', space=vmem, size = 0x1000, scoped, tag = 'input window, operand 0']
    #allocation3 [shape = 's32[2]{0}', space=sflag, size = 0x8, scoped, tag = 'scoped memory for tpu_custom_call.1']
    #allocation4 [shape = 's32[2]{0}', space=sflag, size = 0x8, scoped, tag = 'scoped memory for tpu_custom_call.1']
    #allocation5 [shape = 'u8[8192]{0}', space=vmem, size = 0x2000, scoped, tag = 'input window, operand 1, single buffered']
    #allocation6 [shape = 's32[1]{0}', space=sflag, size = 0x4, scoped, tag = 'scoped memory for tpu_custom_call.1']
    #allocation7 [shape = 'u8[512]{0}', space=vmem, size = 0x400, scoped, tag = 'input window, operand 2, single buffered']
    #allocation8 [shape = 'u8[4096]{0}', space=vmem, size = 0x1000, scoped, tag = 'output window, operand 0']
    #allocation9 [shape = 'u8[4096]{0}', space=vmem, size = 0x1000, scoped, tag = 'output window, operand 1']
    #allocation10 [shape = 's32[2]{0}', space=sflag, size = 0x8, scoped, tag = 'scoped memory for tpu_custom_call.1']
    #allocation11 [shape = 'u8[4096]{0}', space=vmem, size = 0x1000, scoped, tag = 'output window, operand 2']
    %11 = vsyncpa [#allocation3], 0
    %s12 = scalar_lea.sflag [#allocation3], 1
    %13 = vsyncpa %s12, 0
    %14 = vsyncpa [#allocation6], 0
    %15 = vsyncpa [#allocation4], 0
    %s16 = scalar_lea.sflag [#allocation4], 1
    %17 = vsyncpa %s16, 0
    %18 = vsyncpa [#allocation10], 0
    %s19 = scalar_lea.sflag [#allocation10], 1
    %20 = vsyncpa %s19, 0
    loop: start=0, step=1, limit=4
    $region2: #{tpu_custom_call.1} parent=1 // loop_pre_header
      _
    $region3: #{tpu_custom_call.1} parent=1 // loop_header
      %s22 = sphi 0, %s26
      %p23 = scmp.ge.s32.totalorder %s22, 4
      %s29 = sphi 0, %s41
      %s30 = sphi 0, %s37
      %s31 = sphi 0, %s29
      %s32 = sphi 0, %s30
      %s33 = sphi 0, %s31
      %s34 = sphi 0, %s32
      %s46 = sphi 0, %s48
      %s49 = sphi 0, %s46
      %s50 = sphi 0, %s49
      %s66 = sphi 0, %s50
      %s70 = sphi 0, %s70
      %s72 = sphi 0, %s70
      %s73 = sphi 0, %s72
      %s87 = sphi 0, %s73
      %s91 = sphi 0, %s91
      %s93 = sphi 0, %s91
      %s94 = sphi 0, %s93
      %s108 = sphi 0, %s94
      %s116 = sphi 0, %s118
      %s119 = sphi 0, %s116
      %s120 = sphi 0, %s119
      %s136 = sphi 0, %s120
      %s144 = sphi 0, %s146
      %s147 = sphi 0, %s144
      %s148 = sphi 0, %s147
      %s164 = sphi 0, %s148
      %s172 = sphi 0, %s174
      %s175 = sphi 0, %s172
      %s176 = sphi 0, %s175
      %s192 = sphi 0, %s176
    $region4: #{tpu_custom_call.1} parent=1 // loop_header_branch
      %25 = sbr.rel (%p23) target = $region8
    $region5: #{tpu_custom_call.1} parent=1 // loop_body
      %s27 = ssub.s32 %s22, 1
      %s28 = ssub.s32 %s22, 2
      %s35 = sadd.s32 1, %s30
      %p36 = scmp.ge.s32.totalorder %s35, 1
      %s37 = scalar_select %p36, 0, %s35
      %s38 = sadd.s32 1, %s29
      %s39 = scalar_select %p36, %s38, %s29
      %p40 = scmp.ge.s32.totalorder %s39, 2
      %s41 = scalar_select %p40, 0, %s39
      %s42 = ssub.s32 %s29, %s41
      %s43 = ssub.s32 %s30, %s37
      %s44 = sor.u32 %s42, %s43
      %p45 = scmp.eq.s32.totalorder %s44, 0
      %s47 = sadd.s32 %s46, 1
      %s48 = scalar_select %p45, %s46, %s47
      %p51 = pneg %p45
      %p52 = scmp.eq.s32.totalorder %s22, 1
      %p53 = por %p51, %p52
      %p54 = scmp.ne.s32.totalorder %s46, %s49
      %p55 = scmp.eq.s32.totalorder %s22, 0
      %p56 = por %p54, %p55
      %p57 = scmp.ne.s32.totalorder %s46, %s49
      %p58 = scmp.eq.s32.totalorder %s27, 1
      %p59 = por %p57, %p58
      %p60 = scmp.ne.s32.totalorder %s49, %s50
      %p61 = scmp.eq.s32.totalorder %s27, 0
      %p62 = por %p60, %p61
      %p63 = scmp.ne.s32.totalorder %s49, %s50
      %p64 = scmp.eq.s32.totalorder %s28, 1
      %p65 = por %p63, %p64
      %p67 = scmp.ne.s32.totalorder %s50, %s66
      %p68 = scmp.eq.s32.totalorder %s28, 0
      %p69 = por %p67, %p68
      %s71 = sadd.s32 %s70, 1
      %p74 = scmp.eq.s32.totalorder %s22, 1
      %p75 = scmp.ne.s32.totalorder %s70, %s72
      %p76 = scmp.eq.s32.totalorder %s22, 0
      %p77 = por %p75, %p76
      %p78 = scmp.ne.s32.totalorder %s70, %s72
      %p79 = scmp.eq.s32.totalorder %s27, 1
      %p80 = por %p78, %p79
      %p81 = scmp.ne.s32.totalorder %s72, %s73
      %p82 = scmp.eq.s32.totalorder %s27, 0
      %p83 = por %p81, %p82
      %p84 = scmp.ne.s32.totalorder %s72, %s73
      %p85 = scmp.eq.s32.totalorder %s28, 1
      %p86 = por %p84, %p85
      %p88 = scmp.ne.s32.totalorder %s73, %s87
      %p89 = scmp.eq.s32.totalorder %s28, 0
      %p90 = por %p88, %p89
      %s92 = sadd.s32 %s91, 1
      %p95 = scmp.eq.s32.totalorder %s22, 1
      %p96 = scmp.ne.s32.totalorder %s91, %s93
      %p97 = scmp.eq.s32.totalorder %s22, 0
      %p98 = por %p96, %p97
      %p99 = scmp.ne.s32.totalorder %s91, %s93
      %p100 = scmp.eq.s32.totalorder %s27, 1
      %p101 = por %p99, %p100
      %p102 = scmp.ne.s32.totalorder %s93, %s94
      %p103 = scmp.eq.s32.totalorder %s27, 0
      %p104 = por %p102, %p103
      %p105 = scmp.ne.s32.totalorder %s93, %s94
      %p106 = scmp.eq.s32.totalorder %s28, 1
      %p107 = por %p105, %p106
      %p109 = scmp.ne.s32.totalorder %s94, %s108
      %p110 = scmp.eq.s32.totalorder %s28, 0
      %p111 = por %p109, %p110
      %s112 = ssub.s32 %s29, %s41
      %s113 = ssub.s32 %s30, %s37
      %s114 = sor.u32 %s112, %s113
      %p115 = scmp.eq.s32.totalorder %s114, 0
      %s117 = sadd.s32 %s116, 1
      %s118 = scalar_select %p115, %s116, %s117
      %p121 = pneg %p115
      %p122 = scmp.eq.s32.totalorder %s22, 1
      %p123 = por %p121, %p122
      %p124 = scmp.ne.s32.totalorder %s116, %s119
      %p125 = scmp.eq.s32.totalorder %s22, 0
      %p126 = por %p124, %p125
      %p127 = scmp.ne.s32.totalorder %s116, %s119
      %p128 = scmp.eq.s32.totalorder %s27, 1
      %p129 = por %p127, %p128
      %p130 = scmp.ne.s32.totalorder %s119, %s120
      %p131 = scmp.eq.s32.totalorder %s27, 0
      %p132 = por %p130, %p131
      %p133 = scmp.ne.s32.totalorder %s119, %s120
      %p134 = scmp.eq.s32.totalorder %s28, 1
      %p135 = por %p133, %p134
      %p137 = scmp.ne.s32.totalorder %s120, %s136
      %p138 = scmp.eq.s32.totalorder %s28, 0
      %p139 = por %p137, %p138
      %s140 = ssub.s32 %s29, %s41
      %s141 = ssub.s32 %s30, %s37
      %s142 = sor.u32 %s140, %s141
      %p143 = scmp.eq.s32.totalorder %s142, 0
      %s145 = sadd.s32 %s144, 1
      %s146 = scalar_select %p143, %s144, %s145
      %p149 = pneg %p143
      %p150 = scmp.eq.s32.totalorder %s22, 1
      %p151 = por %p149, %p150
      %p152 = scmp.ne.s32.totalorder %s144, %s147
      %p153 = scmp.eq.s32.totalorder %s22, 0
      %p154 = por %p152, %p153
      %p155 = scmp.ne.s32.totalorder %s144, %s147
      %p156 = scmp.eq.s32.totalorder %s27, 1
      %p157 = por %p155, %p156
      %p158 = scmp.ne.s32.totalorder %s147, %s148
      %p159 = scmp.eq.s32.totalorder %s27, 0
      %p160 = por %p158, %p159
      %p161 = scmp.ne.s32.totalorder %s147, %s148
      %p162 = scmp.eq.s32.totalorder %s28, 1
      %p163 = por %p161, %p162
      %p165 = scmp.ne.s32.totalorder %s148, %s164
      %p166 = scmp.eq.s32.totalorder %s28, 0
      %p167 = por %p165, %p166
      %s168 = ssub.s32 %s29, %s41
      %s169 = ssub.s32 %s30, %s37
      %s170 = sor.u32 %s168, %s169
      %p171 = scmp.eq.s32.totalorder %s170, 0
      %s173 = sadd.s32 %s172, 1
      %s174 = scalar_select %p171, %s172, %s173
      %p177 = pneg %p171
      %p178 = scmp.eq.s32.totalorder %s22, 1
      %p179 = por %p177, %p178
      %p180 = scmp.ne.s32.totalorder %s172, %s175
      %p181 = scmp.eq.s32.totalorder %s22, 0
      %p182 = por %p180, %p181
      %p183 = scmp.ne.s32.totalorder %s172, %s175
      %p184 = scmp.eq.s32.totalorder %s27, 1
      %p185 = por %p183, %p184
      %p186 = scmp.ne.s32.totalorder %s175, %s176
      %p187 = scmp.eq.s32.totalorder %s27, 0
      %p188 = por %p186, %p187
      %p189 = scmp.ne.s32.totalorder %s175, %s176
      %p190 = scmp.eq.s32.totalorder %s28, 1
      %p191 = por %p189, %p190
      %p193 = scmp.ne.s32.totalorder %s176, %s192
      %p194 = scmp.eq.s32.totalorder %s28, 0
      %p195 = por %p193, %p194
      %p196 = scmp.le.s32.totalorder 1, %s22
      %p197 = scmp.lt.s32.totalorder %s22, 3
      %p198 = pnand %p196, %p197
      %p199 = pneg %p198
      // Predicated region
      $region9: #{tpu_custom_call.1} parent=5 // pred_check
        _
      $region10: #{tpu_custom_call.1} parent=5 // pred_check_branch
        %201 = sbr.rel (%p198) target = $region12
      $region11: #{tpu_custom_call.1} parent=5 // pred_region
        %s202 = ssub.s32 %s22, 1
        // Predicated region
        $region13: #{tpu_custom_call.1} parent=11 // pred_check
          %p203 = pneg %p83
        $region14: #{tpu_custom_call.1} parent=11 // pred_check_branch
          %205 = sbr.rel (%p203) target = $region16
        $region15: #{tpu_custom_call.1} parent=11 // pred_region
          %s207 = ssub.s32 256, 256
          %208 = vsyncadd [#allocation6], %s207
          %s209 = sshll.u32 [#allocation5], 4
          %s210 = int_to_ptr.vmem [resolvable:$true] %s209
          %215 = dma.hbm_to_vmem [thread:$0]  %s1, 256, %s210, [#allocation6], 64, 64, 4
        $region16: #{tpu_custom_call.1} parent=11 // pred_fallthru
          _
        // Predicated region
        $region17: #{tpu_custom_call.1} parent=11 // pred_check
          %p216 = pneg %p104
        $region18: #{tpu_custom_call.1} parent=11 // pred_check_branch
          %218 = sbr.rel (%p216) target = $region20
        $region19: #{tpu_custom_call.1} parent=11 // pred_region
          %s220 = ssub.s32 16, 16
          %221 = vsyncadd [#allocation6], %s220
          %s223 = sshll.u32 [#allocation7], 4
          %s224 = int_to_ptr.vmem [resolvable:$true] %s223
          %226 = dma.hbm_to_vmem [thread:$0]  %s2, 16, %s224, [#allocation6]
        $region20: #{tpu_custom_call.1} parent=11 // pred_fallthru
          _
      $region12: #{tpu_custom_call.1} parent=5 // pred_fallthru
        _
      %p227 = scmp.lt.s32.totalorder %s22, 2
      // Predicated region
      $region21: #{tpu_custom_call.1} parent=5 // pred_check
        %p228 = pneg %p227
      $region22: #{tpu_custom_call.1} parent=5 // pred_check_branch
        %230 = sbr.rel (%p228) target = $region24
      $region23: #{tpu_custom_call.1} parent=5 // pred_region
        // Predicated region
        $region25: #{tpu_custom_call.1} parent=23 // pred_check
          %p231 = pneg %p56
        $region26: #{tpu_custom_call.1} parent=23 // pred_check_branch
          %233 = sbr.rel (%p231) target = $region28
        $region27: #{tpu_custom_call.1} parent=23 // pred_region
          %s234 = sand.u32 %s46, 1
          %s235 = scalar_lea.sflag [#allocation3], %s234
          %s236 = sand.u32 %s46, 1
          %s237 = smul.addr %s236, 4
          %s238 = scalar_lea.vmem [#allocation2], %s237
          %s240 = ssub.s32 64, 64
          %241 = vsyncadd %s235, %s240
          %s242 = sadd.s32 %s30, %s29
          %s243 = smul.addr %s242, 64
          %s244 = scalar_lea.hbm %s0, %s243
          %s246 = sshll.u32 %s238, 4
          %s247 = int_to_ptr.vmem [resolvable:$true] %s246
          %249 = dma.hbm_to_vmem [thread:$0]  %s244, 64, %s247, %s235
        $region28: #{tpu_custom_call.1} parent=23 // pred_fallthru
          _
      $region24: #{tpu_custom_call.1} parent=5 // pred_fallthru
        _
      %p250 = scmp.le.s32.totalorder 1, %s22
      %p251 = scmp.lt.s32.totalorder %s22, 3
      %p252 = pnand %p250, %p251
      %p253 = pneg %p252
      // Predicated region
      $region29: #{tpu_custom_call.1} parent=5 // pred_check
        _
      $region30: #{tpu_custom_call.1} parent=5 // pred_check_branch
        %255 = sbr.rel (%p252) target = $region32
      $region31: #{tpu_custom_call.1} parent=5 // pred_region
        %s256 = ssub.s32 %s22, 1
        %s257 = sand.u32 %s49, 1
        %s258 = scalar_lea.sflag [#allocation3], %s257
        %s259 = sand.u32 %s49, 1
        %s260 = smul.addr %s259, 4
        %s261 = scalar_lea.vmem [#allocation2], %s260
        // Predicated region
        $region33: #{tpu_custom_call.1} parent=31 // pred_check
          %p262 = pneg %p62
        $region34: #{tpu_custom_call.1} parent=31 // pred_check_branch
          %264 = sbr.rel (%p262) target = $region36
        $region35: #{tpu_custom_call.1} parent=31 // pred_region
          %265 = dma.done %s258, 64
        $region36: #{tpu_custom_call.1} parent=31 // pred_fallthru
          _
        // Predicated region
        $region37: #{tpu_custom_call.1} parent=31 // pred_check
          %p266 = pneg %p83
        $region38: #{tpu_custom_call.1} parent=31 // pred_check_branch
          %268 = sbr.rel (%p266) target = $region40
        $region39: #{tpu_custom_call.1} parent=31 // pred_region
          %269 = dma.done [#allocation6], 256
        $region40: #{tpu_custom_call.1} parent=31 // pred_fallthru
          _
        // Predicated region
        $region41: #{tpu_custom_call.1} parent=31 // pred_check
          %p270 = pneg %p104
        $region42: #{tpu_custom_call.1} parent=31 // pred_check_branch
          %272 = sbr.rel (%p270) target = $region44
        $region43: #{tpu_custom_call.1} parent=31 // pred_region
          %273 = dma.done [#allocation6], 16
        $region44: #{tpu_custom_call.1} parent=31 // pred_fallthru
          _
        %s274 = sand.u32 %s49, 1
        %s275 = scalar_lea.sflag [#allocation3], %s274
        %s276 = sand.u32 %s49, 1
        %s277 = smul.addr %s276, 4
        %s278 = scalar_lea.vmem [#allocation2], %s277
        %p279 = pneg %p62
        %p280 = pneg %p59
        %p281 = pneg %p83
        %p282 = pneg %p80
        %p283 = pneg %p104
        %p284 = pneg %p101
        %p285 = pneg %p132
        %p286 = pneg %p129
        %s287 = sand.u32 %s119, 1
        %s288 = scalar_lea.sflag [#allocation4], %s287
        %s289 = sand.u32 %s119, 1
        %s290 = smul.addr %s289, 4
        %s291 = scalar_lea.vmem [#allocation8], %s290
        %p292 = pneg %p160
        %p293 = pneg %p157
        %s294 = sand.u32 %s27, 1
        %s295 = scalar_lea.sflag [#allocation10], %s294
        %s296 = sand.u32 %s147, 1
        %s297 = smul.addr %s296, 4
        %s298 = scalar_lea.vmem [#allocation9], %s297
        %p299 = pneg %p188
        %p300 = pneg %p185
        %s301 = sand.u32 %s27, 1
        %s302 = scalar_lea.sflag [#allocation10], %s301
        %s303 = sand.u32 %s175, 1
        %s304 = smul.addr %s303, 4
        %s305 = scalar_lea.vmem [#allocation11], %s304
        %v307 = vld [vmem:[%s261] sm:$0xf]
        %v308 = vld [vmem:[#allocation5] sm:$0xf]
        %v309 = vld [vmem:[#allocation5 + $0x4] sm:$0xf]
        %v310 = vld [vmem:[#allocation5 + $0x8] sm:$0xf]
        %v311 = vld [vmem:[#allocation5 + $0xc] sm:$0xf]
        %v312 = vld [vmem:[#allocation7] sm:$0x1]
        %v314 = vlaneseq
        %v315 = vshrl.u32 %v314, 7
        %v316 = vsub.s32 0, %v315
        %v317 = vrot.slane %v312, %v316
        %v323 = vunpack.c.l.b16 %v308
        %v324 = vunpack.c.l.b16 %v309
        %v325 = vunpack.c.l.b16 %v310
        %v326 = vunpack.c.l.b16 %v311
        %v327 = vpack.c.b16 %v324, %v323
        %v328 = vpack.c.b16 %v326, %v325
        %vm331 = vcmask 261120
        %v333 = vsel %vm331, %v307, 0
        %335 = vmatprep.subr.bf16.mxu0 0
        %336 = vmatpush1.bf16.msra.mxu0 %v327
        %337 = vmatprep.subr.bf16.mxu0 0
        %338 = vmatpush1.bf16.msra.mxu0 %v328
        %339 = vmatprep.subr.bf16.mxu0 0
        %340 = vmatpush1.bf16.msra.mxu0 0
        %341 = vmatprep.subr.bf16.mxu0 0
        %342 = vmatpush1.bf16.msra.mxu0 0
        %343 = vmatprep.subr.bf16.mxu0 0
        %344 = vmatpush1.bf16.msra.mxu0 0
        %345 = vmatprep.subr.bf16.mxu0 0
        %346 = vmatpush1.bf16.msra.mxu0 0
        %347 = vmatprep.subr.bf16.mxu0 0
        %348 = vmatpush1.bf16.msra.mxu0 0
        %349 = vmatprep.subr.bf16.mxu0 0
        %350 = vmatpush1.bf16.msra.mxu0 0
        %351 = vmatprep.subr.bf16.mxu0 0
        %352 = vmatpush1.bf16.msra.mxu0 0
        %353 = vmatprep.subr.bf16.mxu0 0
        %354 = vmatpush1.bf16.msra.mxu0 0
        %355 = vmatprep.subr.bf16.mxu0 0
        %356 = vmatpush1.bf16.msra.mxu0 0
        %357 = vmatprep.subr.bf16.mxu0 0
        %358 = vmatpush1.bf16.msra.mxu0 0
        %359 = vmatprep.subr.bf16.mxu0 0
        %360 = vmatpush1.bf16.msra.mxu0 0
        %361 = vmatprep.subr.bf16.mxu0 0
        %362 = vmatpush1.bf16.msra.mxu0 0
        %363 = vmatprep.subr.bf16.mxu0 0
        %364 = vmatpush1.bf16.msra.mxu0 0
        %365 = vmatprep.subr.bf16.mxu0 0
        %366 = vmatpush1.bf16.msra.mxu0 0
        %367 = vmatprep.mubr.bf16.mxu0 0
        %368 = vmatmul.mubr.bf16.gmra.mrb[0].mxu0 %v333
        %v369 = vpop.f32.mrb[0].mxu0
        %v370 = vadd.f32 %v317, %v369
        %v371 = vpop.f32.mrb[0].mxu0
        %v372 = vpop.f32.mrb[0].mxu0
        %v373 = vpop.f32.mrb[0].mxu0
        %374 = vdwg.mxu0
        %v375 = vmul.f32 %v370, 0.35355338
        %v376 = vpack.c.bf16 %v375, %v375
        %vm377 = vcmask 257024
        %378 = vst.msk [vmem:[%s291] sm:$0xf] %vm377, %v376
        %v379 = vpack.c.bf16 %v370, %v370
        %v381 = vunpack.c.l.b16 %v379
        %v382 = vpack.c.b16 %v381, %v381
        %383 = vrot.lane.b32.xlu0 %v382, 96
        %v384 = vpop.permute.xlu0 %383
        %386 = vst.msk [vmem:[%s298] sm:$0xf] %vm377, %v384
        %387 = vrot.lane.b32.xlu0 %v382, 64
        %v388 = vpop.permute.xlu0 %387
        %390 = vst.msk [vmem:[%s305] sm:$0xf] %vm377, %v388
        %s391 = sand.u32 %s119, 1
        %s392 = scalar_lea.sflag [#allocation4], %s391
        %s393 = sand.u32 %s119, 1
        %s394 = smul.addr %s393, 4
        %s395 = scalar_lea.vmem [#allocation8], %s394
        %s396 = sand.u32 %s27, 1
        %s397 = scalar_lea.sflag [#allocation10], %s396
        %s398 = sand.u32 %s147, 1
        %s399 = smul.addr %s398, 4
        %s400 = scalar_lea.vmem [#allocation9], %s399
        %s401 = sand.u32 %s27, 1
        %s402 = scalar_lea.sflag [#allocation10], %s401
        %s403 = sand.u32 %s175, 1
        %s404 = smul.addr %s403, 4
        %s405 = scalar_lea.vmem [#allocation11], %s404
        // Predicated region
        $region45: #{tpu_custom_call.1} parent=31 // pred_check
          %p406 = pneg %p129
        $region46: #{tpu_custom_call.1} parent=31 // pred_check_branch
          %408 = sbr.rel (%p406) target = $region48
        $region47: #{tpu_custom_call.1} parent=31 // pred_region
          %s410 = ssub.s32 64, 64
          %411 = vsyncadd %s392, %s410
          %s412 = sadd.s32 %s32, %s31
          %s413 = smul.addr %s412, 64
          %s414 = scalar_lea.hbm %s3, %s413
          %s416 = sshll.u32 %s395, 4
          %s417 = int_to_ptr.vmem [resolvable:$true] %s416
          %419 = dma.vmem_to_hbm [thread:$0]  %s417, 64, %s414, %s392
        $region48: #{tpu_custom_call.1} parent=31 // pred_fallthru
          _
        // Predicated region
        $region49: #{tpu_custom_call.1} parent=31 // pred_check
          %p420 = pneg %p157
        $region50: #{tpu_custom_call.1} parent=31 // pred_check_branch
          %422 = sbr.rel (%p420) target = $region52
        $region51: #{tpu_custom_call.1} parent=31 // pred_region
          %s424 = ssub.s32 64, 64
          %425 = vsyncadd %s397, %s424
          %s426 = sadd.s32 %s32, %s31
          %s427 = smul.addr %s426, 64
          %s428 = scalar_lea.hbm %s4, %s427
          %s430 = sshll.u32 %s400, 4
          %s431 = int_to_ptr.vmem [resolvable:$true] %s430
          %433 = dma.vmem_to_hbm [thread:$0]  %s431, 64, %s428, %s397
        $region52: #{tpu_custom_call.1} parent=31 // pred_fallthru
          _
        // Predicated region
        $region53: #{tpu_custom_call.1} parent=31 // pred_check
          %p434 = pneg %p185
        $region54: #{tpu_custom_call.1} parent=31 // pred_check_branch
          %436 = sbr.rel (%p434) target = $region56
        $region55: #{tpu_custom_call.1} parent=31 // pred_region
          %s438 = ssub.s32 64, 64
          %439 = vsyncadd %s402, %s438
          %s440 = sadd.s32 %s32, %s31
          %s441 = smul.addr %s440, 64
          %s442 = scalar_lea.hbm %s5, %s441
          %s444 = sshll.u32 %s405, 4
          %s445 = int_to_ptr.vmem [resolvable:$true] %s444
          %447 = dma.vmem_to_hbm [thread:$0]  %s445, 64, %s442, %s402
        $region56: #{tpu_custom_call.1} parent=31 // pred_fallthru
          _
      $region32: #{tpu_custom_call.1} parent=5 // pred_fallthru
        _
      %p448 = scmp.le.s32.totalorder 2, %s22
      // Predicated region
      $region57: #{tpu_custom_call.1} parent=5 // pred_check
        %p449 = pneg %p448
      $region58: #{tpu_custom_call.1} parent=5 // pred_check_branch
        %451 = sbr.rel (%p449) target = $region60
      $region59: #{tpu_custom_call.1} parent=5 // pred_region
        %s452 = ssub.s32 %s22, 2
        // Predicated region
        $region61: #{tpu_custom_call.1} parent=59 // pred_check
          %p453 = pneg %p135
        $region62: #{tpu_custom_call.1} parent=59 // pred_check_branch
          %455 = sbr.rel (%p453) target = $region64
        $region63: #{tpu_custom_call.1} parent=59 // pred_region
          %s456 = sand.u32 %s120, 1
          %s457 = scalar_lea.sflag [#allocation4], %s456
          %s458 = sand.u32 %s120, 1
          %s459 = smul.addr %s458, 4
          %s460 = scalar_lea.vmem [#allocation8], %s459
          %461 = dma.done %s457, 64
        $region64: #{tpu_custom_call.1} parent=59 // pred_fallthru
          _
        // Predicated region
        $region65: #{tpu_custom_call.1} parent=59 // pred_check
          %p462 = pneg %p163
        $region66: #{tpu_custom_call.1} parent=59 // pred_check_branch
          %464 = sbr.rel (%p462) target = $region68
        $region67: #{tpu_custom_call.1} parent=59 // pred_region
          %s465 = sand.u32 %s28, 1
          %s466 = scalar_lea.sflag [#allocation10], %s465
          %s467 = sand.u32 %s148, 1
          %s468 = smul.addr %s467, 4
          %s469 = scalar_lea.vmem [#allocation9], %s468
          %470 = dma.done %s466, 64
        $region68: #{tpu_custom_call.1} parent=59 // pred_fallthru
          _
        // Predicated region
        $region69: #{tpu_custom_call.1} parent=59 // pred_check
          %p471 = pneg %p191
        $region70: #{tpu_custom_call.1} parent=59 // pred_check_branch
          %473 = sbr.rel (%p471) target = $region72
        $region71: #{tpu_custom_call.1} parent=59 // pred_region
          %s474 = sand.u32 %s28, 1
          %s475 = scalar_lea.sflag [#allocation10], %s474
          %s476 = sand.u32 %s176, 1
          %s477 = smul.addr %s476, 4
          %s478 = scalar_lea.vmem [#allocation11], %s477
          %479 = dma.done %s475, 64
        $region72: #{tpu_custom_call.1} parent=59 // pred_fallthru
          _
      $region60: #{tpu_custom_call.1} parent=5 // pred_fallthru
        _
    $region6: #{tpu_custom_call.1} parent=1 // loop_footer
      %s26 = sadd.s32 1, %s22
    $region7: #{tpu_custom_call.1} parent=1 // loop_footer_branch
      %21 = sbr.rel target = $region3
    $region8: #{tpu_custom_call.1} parent=1 // loop_exit
      _
    %480 = vsyncpa [#allocation3], 1
    %s481 = scalar_lea.sflag [#allocation3], 1
    %482 = vsyncpa %s481, 1
    %483 = vsyncpa [#allocation6], 1
    %484 = vsyncpa [#allocation4], 1
    %s485 = scalar_lea.sflag [#allocation4], 1
    %486 = vsyncpa %s485, 1
    %487 = vsyncpa [#allocation10], 1
    %s488 = scalar_lea.sflag [#allocation10], 1
    %489 = vsyncpa %s488, 1

</llo_original>
